<compile_context>
chip_gen: v5e
topology: v5e:2x2
jax: 0.10.0
libtpu: 0.0.40
codegen_flags: <defaults>
</compile_context>

<pallas_src>
import math

import jax
import jax.numpy as jnp
from jax.experimental import pallas as pl
from jax.experimental.pallas import tpu as pltpu


# ----------------------------------------------------------------------------
# Parameter setup (__init__ of the PyTorch module) -- plain JAX, done once.
# ----------------------------------------------------------------------------
def make_positional_encoding(h_dim: int, seq_len: int, dtype=jnp.float32) -> jnp.ndarray:
    """Reproduces the __init__ buffer of PositionalEmbedding exactly (built once).

    Note: per the reference module, the frequency exponent is indexed by the
    *sequence position* (2*floor(pos/2)/h_dim), and sin/cos are applied to the same
    pre-activation values on even/odd hidden columns.
    """
    assert seq_len % 2 == 0
    pos = jnp.arange(seq_len, dtype=jnp.float32).reshape(-1, 1)                        # (S, 1)
    freq_exp = 2.0 * jnp.floor(jnp.arange(seq_len, dtype=jnp.float32) * 0.5) / h_dim   # (S,)
    freq = jnp.power(jnp.float32(10000.0), freq_exp).reshape(-1, 1)                    # (S, 1)
    pe = jnp.broadcast_to(pos / freq, (seq_len, h_dim))                                # (S, H)
    col = jnp.arange(h_dim)
    pe = jnp.where((col % 2 == 0)[None, :], jnp.sin(pe), jnp.cos(pe))
    # Cast ONCE here (hoisted out of the forward path).
    return pe.astype(dtype)


# ----------------------------------------------------------------------------
# Helpers
# ----------------------------------------------------------------------------
def _round_up(x: int, m: int) -> int:
    return ((x + m - 1) // m) * m


def _sublane_multiple(dtype) -> int:
    """Native sublane tile rows: 8 for 4-byte, 16 for 2-byte, 32 for 1-byte dtypes."""
    itemsize = jnp.dtype(dtype).itemsize
    return max(8, 32 // max(1, itemsize))


def _default_target_block_bytes() -> int:
    """~4 MiB x-tiles on v6e/v7x (fast HBM => amortize per-step overhead), 2 MiB otherwise."""
    try:
        kind = jax.devices()[0].device_kind.lower()
    except Exception:
        return 2 << 20
    if "v4" in kind or "v5" in kind:
        return 2 << 20
    return 4 << 20


# ----------------------------------------------------------------------------
# Pallas kernel: lane-dense elementwise add with (optionally period-k) pe rows.
# ----------------------------------------------------------------------------
def _make_add_pe_kernel(groups: int, pe_rows: int):
    if groups <= 1:
        # pe block is (1, L) (broadcast over sublanes) or (Bt, L) (equal shape).
        def kernel(x_ref, pe_ref, o_ref):
            o_ref[...] = x_ref[...] + pe_ref[...]
    else:
        # x/o blocks are (groups*pe_rows, L); pe block is (pe_rows, L) and repeats
        # with period pe_rows along the rows.  `groups` is tiny (<= 16), static unroll.
        def kernel(x_ref, pe_ref, o_ref):
            pe = pe_ref[...]
            for g in range(groups):
                rows = pl.ds(g * pe_rows, pe_rows)
                o_ref[rows, :] = x_ref[rows, :] + pe
    return kernel


# ----------------------------------------------------------------------------
# Forward wrapper
# ----------------------------------------------------------------------------
def positional_embedding_forward(
    x: jnp.ndarray,
    encoding: jnp.ndarray,
    *,
    target_block_bytes: int | None = None,
    in_place: bool = False,
) -> jnp.ndarray:
    """out = x + encoding[:S][None, ...], broadcast over batch.

    x: (B, S, H); encoding: (seq_len, H) from make_positional_encoding, ideally already
    in x.dtype so no per-call cast happens.

    in_place=True aliases the output with x's buffer (input_output_aliases).  This does
    NOT reduce HBM traffic (still 1 read + 1 write); it only reduces footprint, and only
    if x is donated at the jit boundary and the flattening reshape stays a bitcast.
    """
    B, S, H = x.shape
    if encoding.shape[0] < S:
        raise ValueError(
            f"encoding has {encoding.shape[0]} positions but input sequence length is {S}")
    pe = encoding[:S] if encoding.shape[0] != S else encoding
    if pe.dtype != x.dtype:
        # Fallback only -- precompute the encoding in the model dtype to skip this cast.
        pe = pe.astype(x.dtype)

    dtype = x.dtype
    itemsize = jnp.dtype(dtype).itemsize
    sm = _sublane_multiple(dtype)          # 8 (f32) / 16 (bf16) / 32 (int8, fp8)
    N = S * H
    if target_block_bytes is None:
        target_block_bytes = _default_target_block_bytes()

    # ---- Fold small / sublane-misaligned batches into the row dimension -------------
    # Pick the smallest k with (B*k) % sm == 0 and k | N, so row tiles are full sublane
    # tiles (unmasked stores, no 4x VMEM padding waste) for inference-style batches.
    k = 1
    if B % sm != 0:
        need = sm // math.gcd(B, sm)
        if need > 1 and N % need == 0:
            k = need
    R, C = B * k, N // k

    x2 = x.reshape(R, C)
    pe2 = pe.reshape(N).reshape(k, C)      # k == 1 -> (1, N) broadcast row

    # ---- Tile sizes (block-first, per review) ---------------------------------------
    if R % sm == 0:
        Bt = sm
    else:
        Bt = R                             # full-extent row block (legal); pads to sm in VMEM
    Bt_pad = _round_up(Bt, sm)

    # Lane tile: near target_block_bytes for the x tile, multiple of 128; full extent
    # if the row is short.  cdiv grid + masked last block handles ragged C.
    L = target_block_bytes // (Bt_pad * itemsize)
    L = max(128, (L // 128) * 128)
    if L >= C:
        L = C
    n_lane = pl.cdiv(C, L)
    n_row = pl.cdiv(R, Bt)

    # v7x has 2 TensorCores: don't leave one idle on a 1-step grid when the row is
    # wide enough to split (harmless on v5e/v6e).
    if n_lane * n_row == 1 and C >= 256:
        L_split = _round_up(pl.cdiv(C, 2), 128)
        if L_split < C:
            L = L_split
            n_lane = pl.cdiv(C, L)

    # ---- VMEM accounting (actual tiles, incl. sublane padding of the pe block) ------
    L_pad = _round_up(L, 128)
    x_tile_bytes = Bt_pad * L_pad * itemsize
    pe_tile_bytes = _round_up(k, sm) * L_pad * itemsize   # (k, L) block pads to sm rows
    # Double-buffered x + out + pe, plus headroom for compiler-internal scratch.
    vmem_limit = int(1.25 * (2 * x_tile_bytes + 2 * x_tile_bytes + 2 * pe_tile_bytes)) + (4 << 20)
    vmem_limit = min(vmem_limit, 64 << 20)

    groups = Bt // k if (1 < k < Bt) else 1

    grid = (n_lane, n_row)   # lanes outer, rows inner -> pe block index is row-invariant
                             # so its DMA is skipped across the inner row steps.

    out2 = pl.pallas_call(
        _make_add_pe_kernel(groups=groups, pe_rows=k),
        out_shape=jax.ShapeDtypeStruct((R, C), dtype),
        grid_spec=pltpu.PrefetchScalarGridSpec(
            num_scalar_prefetch=0,
            grid=grid,
            in_specs=[
                pl.BlockSpec((Bt, L), lambda n, r: (r, n)),   # x tile
                pl.BlockSpec((k, L), lambda n, r: (0, n)),    # pe tile (row-invariant)
            ],
            out_specs=pl.BlockSpec((Bt, L), lambda n, r: (r, n)),
        ),
        compiler_params=pltpu.CompilerParams(
            dimension_semantics=("parallel", "parallel"),
            vmem_limit_bytes=vmem_limit,
        ),
        input_output_aliases=({0: 0} if in_place else {}),
    )(x2, pe2)

    return out2.reshape(B, S, H)


# ----------------------------------------------------------------------------
# Self-test
# ----------------------------------------------------------------------------
if __name__ == "__main__":
    key = jax.random.PRNGKey(0)

    def _check(B, S, H, dtype=jnp.float32, tol=1e-6, **kwargs):
        k = jax.random.fold_in(key, B * 100000 + S * 100 + H)
        x = jax.random.normal(k, (B, S, H), dtype=jnp.float32).astype(dtype)
        enc = make_positional_encoding(H, S, dtype=dtype)
        out = jax.block_until_ready(positional_embedding_forward(x, enc, **kwargs))
        ref = x + enc[:S][None, :, :]
        assert out.shape == (B, S, H)
        assert jnp.allclose(out.astype(jnp.float32), ref.astype(jnp.float32),
                            atol=tol, rtol=tol), f"mismatch at {(B, S, H, dtype)}"

    # Module-like small shape: batch=2, seq=8, hidden=32 (fold path: k=4, 2 row groups).
    _check(2, 8, 32)
    # Sublane-aligned batch + lane tiling over the flattened S*H axis.
    _check(8, 16, 64, target_block_bytes=4096)
    # Batch (row) tiling: pe tile's DMA skipped across the inner row steps.
    _check(16, 8, 16, target_block_bytes=4096)
    # Ragged lane dim (S*H not a multiple of the 128-lane tile) -> masked last block.
    _check(8, 10, 48, target_block_bytes=4096)
    # bf16: dtype-aware sublane multiple (16) + fold (k=4, 4 row groups).
    _check(4, 8, 32, dtype=jnp.bfloat16, tol=1e-2)

    print("KERNEL_OK")
</pallas_src>

<mosaic_0001>
module attributes {stable_mosaic.version = 11 : i64} {
  func.func @kernel(%arg0: i32, %arg1: i32, %arg2: memref<8x64xf32, #tpu.memory_space<vmem>>, %arg3: memref<4x64xf32, #tpu.memory_space<vmem>>, %arg4: memref<8x64xf32, #tpu.memory_space<vmem>>) attributes {dimension_semantics = [#tpu.dimension_semantics<parallel>, #tpu.dimension_semantics<parallel>], iteration_bounds = array<i64: 1, 1>, scalar_prefetch = 0 : i64, scratch_operands = 0 : i64, tpu.core_type = #tpu.core_type<tc>, window_params = [{transform_indices = @transform_0, window_bounds = array<i64: 8, 64>}, {transform_indices = @transform_1, window_bounds = array<i64: 4, 64>}, {transform_indices = @transform_2, window_bounds = array<i64: 8, 64>}]} {
    %c0 = arith.constant 0 : index
    %c0_0 = arith.constant 0 : index
    %0 = vector.load %arg3[%c0, %c0_0] : memref<4x64xf32, #tpu.memory_space<vmem>>, vector<4x64xf32>
    %c0_1 = arith.constant 0 : index
    %c0_2 = arith.constant 0 : index
    %1 = vector.load %arg2[%c0_1, %c0_2] : memref<8x64xf32, #tpu.memory_space<vmem>>, vector<4x64xf32>
    %2 = arith.addf %1, %0 : vector<4x64xf32>
    %c0_3 = arith.constant 0 : index
    %c0_4 = arith.constant 0 : index
    %3 = vector.load %arg4[%c0_3, %c0_4] : memref<8x64xf32, #tpu.memory_space<vmem>>, vector<4x64xf32>
    tpu.vector_store %arg4[%c0_3, %c0_4], %2 {strides = array<i32>} : memref<8x64xf32, #tpu.memory_space<vmem>>, vector<4x64xf32>,
    %c4 = arith.constant 4 : index
    %c0_5 = arith.constant 0 : index
    %4 = vector.load %arg2[%c4, %c0_5] : memref<8x64xf32, #tpu.memory_space<vmem>>, vector<4x64xf32>
    %5 = arith.addf %4, %0 : vector<4x64xf32>
    %c4_6 = arith.constant 4 : index
    %c0_7 = arith.constant 0 : index
    %6 = vector.load %arg4[%c4_6, %c0_7] : memref<8x64xf32, #tpu.memory_space<vmem>>, vector<4x64xf32>
    tpu.vector_store %arg4[%c4_6, %c0_7], %5 {strides = array<i32>} : memref<8x64xf32, #tpu.memory_space<vmem>>, vector<4x64xf32>,
    return
  }
  func.func @transform_0(%arg0: i32, %arg1: i32) -> (i32, i32) {
    %c0_i32 = arith.constant 0 : i32
    return %arg1, %arg0 : i32, i32
  }
  func.func @transform_1(%arg0: i32, %arg1: i32) -> (i32, i32) {
    %c0_i32 = arith.constant 0 : i32
    %c0_i32_0 = arith.constant 0 : i32
    return %c0_i32, %arg0 : i32, i32
  }
  func.func @transform_2(%arg0: i32, %arg1: i32) -> (i32, i32) {
    %c0_i32 = arith.constant 0 : i32
    return %arg1, %arg0 : i32, i32
  }
}

</mosaic_0001>

<llo_original>
// kernel: tpu_custom_call.1
$region0: #{tpu_custom_call.1}
  #allocation0 [shape = 'u32[]', space=smem, size = 0x4, offset = 0x4, fixed_abs, tag = 'smem constant byte address 0x4 - core index']
  #allocation1 [shape = 'u32[72,128]{1,0:T(1,128)}', space=vmem, size = 0x9000, scoped, tag = 'internal scratch']
  %s0 = inlined_call_operand.hbm [shape: f32[8,64], index: 0, kind: input, shape index: {}]
  %s1 = inlined_call_operand.hbm [shape: f32[4,64], index: 1, kind: input, shape index: {}]
  %s2 = inlined_call_operand.hbm [shape: f32[8,64], index: 2, kind: output, shape index: {}]
  %s3 = sld [smem:[#allocation0]]
  $region26: #{tpu_custom_call.1} parent=0
    _
  %s5 = ssub.s32 1, %s3
  %s6 = scalar_select 0, %s5, %s3
  $region1: #{tpu_custom_call.1} parent=0
    #allocation2 [shape = 'u8[4096]{0}', space=vmem, size = 0x1000, scoped, tag = 'input window, operand 0, single buffered']
    #allocation3 [shape = 's32[1]{0}', space=sflag, size = 0x4, scoped, tag = 'scoped memory for tpu_custom_call.1']
    #allocation4 [shape = 's32[1]{0}', space=sflag, size = 0x4, scoped, tag = 'scoped memory for tpu_custom_call.1']
    #allocation5 [shape = 'u8[2048]{0}', space=vmem, size = 0x800, scoped, tag = 'input window, operand 1, single buffered']
    #allocation6 [shape = 's32[1]{0}', space=sflag, size = 0x4, scoped, tag = 'scoped memory for tpu_custom_call.1']
    #allocation7 [shape = 'u8[4096]{0}', space=vmem, size = 0x1000, scoped, tag = 'output window, operand 0, single buffered']
    %7 = vsyncpa [#allocation3], 0
    %8 = vsyncpa [#allocation6], 0
    %9 = vsyncpa [#allocation4], 0
    // Predicated region
    $region2: #{tpu_custom_call.1} parent=1 // pred_check
      _
    $region3: #{tpu_custom_call.1} parent=1 // pred_check_branch
      %11 = sbr.rel (0) target = $region5
    $region4: #{tpu_custom_call.1} parent=1 // pred_region
      %13 = vsyncadd [#allocation3], 0
      %s15 = sshll.u32 %s0, 4
      %s16 = int_to_ptr.hbm [resolvable:$true] %s15
      %s17 = sshll.u32 [#allocation2], 4
      %s18 = int_to_ptr.vmem [resolvable:$true] %s17
      %20 = dma.hbm_to_vmem [thread:$0]  %s16, 128, %s18, [#allocation3]
    $region5: #{tpu_custom_call.1} parent=1 // pred_fallthru
      _
    // Predicated region
    $region6: #{tpu_custom_call.1} parent=1 // pred_check
      _
    $region7: #{tpu_custom_call.1} parent=1 // pred_check_branch
      %22 = sbr.rel (0) target = $region9
    $region8: #{tpu_custom_call.1} parent=1 // pred_region
      %24 = vsyncadd [#allocation6], 0
      %s26 = sshll.u32 %s1, 4
      %s27 = int_to_ptr.hbm [resolvable:$true] %s26
      %s28 = sshll.u32 [#allocation5], 4
      %s29 = int_to_ptr.vmem [resolvable:$true] %s28
      %31 = dma.hbm_to_vmem [thread:$0]  %s27, 64, %s29, [#allocation6]
    $region9: #{tpu_custom_call.1} parent=1 // pred_fallthru
      _
    // Predicated region
    $region10: #{tpu_custom_call.1} parent=1 // pred_check
      _
    $region11: #{tpu_custom_call.1} parent=1 // pred_check_branch
      %33 = sbr.rel (0) target = $region13
    $region12: #{tpu_custom_call.1} parent=1 // pred_region
      %35 = dma.done [#allocation3], 128
    $region13: #{tpu_custom_call.1} parent=1 // pred_fallthru
      _
    // Predicated region
    $region14: #{tpu_custom_call.1} parent=1 // pred_check
      _
    $region15: #{tpu_custom_call.1} parent=1 // pred_check_branch
      %37 = sbr.rel (0) target = $region17
    $region16: #{tpu_custom_call.1} parent=1 // pred_region
      %39 = dma.done [#allocation6], 64
    $region17: #{tpu_custom_call.1} parent=1 // pred_fallthru
      _
    %v40 = vld [vmem:[#allocation5] sm:$0xf]
    %v41 = vld [vmem:[#allocation2] sm:$0xf]
    %v42 = vadd.f32 %v41, %v40
    %vm43 = vcmask 519168
    %44 = vst.msk [vmem:[#allocation7] sm:$0xf] %vm43, %v42
    %v45 = vld [vmem:[#allocation2 + $0x4] sm:$0xf]
    %v46 = vadd.f32 %v45, %v40
    %47 = vst.msk [vmem:[#allocation7 + $0x4] sm:$0xf] %vm43, %v46
    // Predicated region
    $region18: #{tpu_custom_call.1} parent=1 // pred_check
      _
    $region19: #{tpu_custom_call.1} parent=1 // pred_check_branch
      %49 = sbr.rel (0) target = $region21
    $region20: #{tpu_custom_call.1} parent=1 // pred_region
      %51 = vsyncadd [#allocation4], 0
      %s53 = sshll.u32 [#allocation7], 4
      %s54 = int_to_ptr.vmem [resolvable:$true] %s53
      %s55 = sshll.u32 %s2, 4
      %s56 = int_to_ptr.hbm [resolvable:$true] %s55
      %58 = dma.vmem_to_hbm [thread:$0]  %s54, 128, %s56, [#allocation4]
    $region21: #{tpu_custom_call.1} parent=1 // pred_fallthru
      _
    // Predicated region
    $region22: #{tpu_custom_call.1} parent=1 // pred_check
      _
    $region23: #{tpu_custom_call.1} parent=1 // pred_check_branch
      %60 = sbr.rel (0) target = $region25
    $region24: #{tpu_custom_call.1} parent=1 // pred_region
      %62 = dma.done [#allocation4], 128
    $region25: #{tpu_custom_call.1} parent=1 // pred_fallthru
      _
    %63 = vsyncpa [#allocation3], 1
    %64 = vsyncpa [#allocation6], 1
    %65 = vsyncpa [#allocation4], 1

</llo_original>
